<compile_context>
chip_gen: v7x
topology: tpu7x:2x2x1
jax: 0.10.0
libtpu: 0.0.40
codegen_flags: <defaults>
</compile_context>

<pallas_src>
import jax
import jax.numpy as jnp
from jax.experimental import pallas as pl
from jax.experimental.pallas import tpu as pltpu

_LANES = 128
# Row-count multiple that is legal for 32-, 16- and 8-bit dtypes
# (sublane packing of 8 / 16 / 32 respectively).
_ROW_MULT = 32


# ----------------------------------------------------------------------------
# Kernels
# ----------------------------------------------------------------------------
def _add_one_kernel(x_ref, o_ref):
    # Elementwise hot path: output = input + 1 (weak literal -> dtype preserved).
    o_ref[...] = x_ref[...] + 1


def _add_one_scalar_kernel(x_ref, o_ref):
    # Scalar path: one 32-bit word in SMEM; no vector loads/stores.
    o_ref[0] = x_ref[0] + 1


# ----------------------------------------------------------------------------
# Per-generation block planning
# ----------------------------------------------------------------------------
def _chip_gen():
    try:
        kind = jax.devices()[0].device_kind.lower()
    except Exception:
        return None
    if "v7" in kind:
        return 7
    if "v6" in kind:
        return 6
    if "v5" in kind:
        return 5
    return None


def _block_plan(itemsize):
    """Returns (max_block_rows, vmem_limit_bytes_or_None) for this chip gen."""
    gen = _chip_gen()
    if gen is not None and gen >= 7:
        target_bytes = 8 << 20     # 8 MiB blocks: step overhead ~6% at 3.2 TB/s
        vmem_limit = 40 << 20      # in+out double-buffered ~32 MiB > 32 MiB default
    elif gen == 6:
        target_bytes = 4 << 20     # 16 MiB pipeline fits the 32 MiB scoped default
        vmem_limit = None
    else:                          # v5e and unknown chips: stay conservative
        target_bytes = 2 << 20     # 8 MiB pipeline fits v5e's 16 MiB scoped default
        vmem_limit = None
    max_rows = (target_bytes // (_LANES * itemsize)) // _ROW_MULT * _ROW_MULT
    return max(_ROW_MULT, max_rows), vmem_limit


def _choose_block_rows(rows, max_rows):
    """Pick a block row-count: >= ~4 balanced blocks for medium arrays (so the
    DMA pipeline and, on v7x, both TensorCores are used), capped at max_rows."""
    if rows <= 2 * _ROW_MULT:
        # Tiny input: single full-extent block (block == array dims is legal).
        return rows
    target = pl.cdiv(rows, 4)
    target = ((target + _ROW_MULT - 1) // _ROW_MULT) * _ROW_MULT
    return max(_ROW_MULT, min(max_rows, target))


# ----------------------------------------------------------------------------
# Array path: lane-dense streaming add
# ----------------------------------------------------------------------------
def _add_one_lane_dense(x2d):
    rows, lanes = x2d.shape
    itemsize = x2d.dtype.itemsize
    max_rows, vmem_limit = _block_plan(itemsize)
    block_rows = _choose_block_rows(rows, max_rows)
    grid = (pl.cdiv(rows, block_rows),)

    cp_kwargs = dict(dimension_semantics=("parallel",))
    if vmem_limit is not None:
        cp_kwargs["vmem_limit_bytes"] = vmem_limit

    return pl.pallas_call(
        _add_one_kernel,
        out_shape=jax.ShapeDtypeStruct((rows, lanes), x2d.dtype),
        grid=grid,
        in_specs=[pl.BlockSpec((block_rows, lanes), lambda i: (i, 0))],
        out_specs=pl.BlockSpec((block_rows, lanes), lambda i: (i, 0)),
        compiler_params=pltpu.CompilerParams(**cp_kwargs),
        cost_estimate=pl.CostEstimate(
            flops=rows * lanes,
            transcendentals=0,
            bytes_accessed=2 * rows * lanes * itemsize,
        ),
    )(x2d)


def _add_one_array(x):
    orig_shape = x.shape
    total = x.size
    if total == 0:
        return x  # empty tensor: nothing to do

    if total % _LANES == 0:
        # Contiguous reshape to (rows, 128) is metadata-only: no extra traffic.
        rows = total // _LANES
        out = _add_one_lane_dense(x.reshape(rows, _LANES))
        return out.reshape(orig_shape)

    # Odd-sized fallback: pad (<128 elems) to a lane multiple, stream through the
    # same tiled lane-dense path (full-width stores, pipelined), then slice.
    flat = x.reshape(total)
    padded = total + (-total) % _LANES
    flat = jnp.pad(flat, (0, padded - total))
    out = _add_one_lane_dense(flat.reshape(padded // _LANES, _LANES))
    return out.reshape(padded)[:total].reshape(orig_shape)


# ----------------------------------------------------------------------------
# Scalar path: single 32-bit word through SMEM
# ----------------------------------------------------------------------------
def _add_one_scalar(x):
    dt = x.dtype
    if dt.itemsize == 4:
        work = x
    elif jnp.issubdtype(dt, jnp.floating):
        work = x.astype(jnp.float32)   # bf16/f16: exact round-trip for +1
    elif jnp.issubdtype(dt, jnp.unsignedinteger):
        work = x.astype(jnp.uint32)
    else:
        work = x.astype(jnp.int32)     # narrow signed ints (cast back wraps)

    out = pl.pallas_call(
        _add_one_scalar_kernel,
        out_shape=jax.ShapeDtypeStruct((1,), work.dtype),
        in_specs=[pl.BlockSpec(memory_space=pltpu.MemorySpace.SMEM)],
        out_specs=pl.BlockSpec(memory_space=pltpu.MemorySpace.SMEM),
    )(work.reshape((1,)))
    return out.reshape(()).astype(dt)


# ----------------------------------------------------------------------------
# Public entry point
# ----------------------------------------------------------------------------
def chaoyang_forward(x):
    """JAX/Pallas equivalent of Chaoyang().forward(x): x + 1, shape/dtype preserved."""
    # TODO(synk): torch promotes bool+1 to int64; we preserve the input dtype instead.
    x = jnp.asarray(x)
    if x.ndim == 0:
        return _add_one_scalar(x)
    return _add_one_array(x)


if __name__ == "__main__":
    key = jax.random.PRNGKey(0)

    # Spec usage: x = torch.tensor(1.0)  ->  scalar in, scalar out (SMEM path).
    x_scalar = jnp.asarray(1.0, dtype=jnp.float32)
    out_scalar = jax.block_until_ready(chaoyang_forward(x_scalar))
    assert out_scalar.shape == x_scalar.shape
    assert out_scalar.dtype == x_scalar.dtype
    assert jnp.allclose(out_scalar, x_scalar + 1.0)

    # Small array (total divisible by 128): lane-dense single-block path.
    x_arr = jax.random.normal(key, (2, 4, 16, 16), dtype=jnp.float32)
    out_arr = jax.block_until_ready(chaoyang_forward(x_arr))
    assert out_arr.shape == x_arr.shape and out_arr.dtype == x_arr.dtype
    assert jnp.allclose(out_arr, x_arr + 1.0)

    # Odd-sized array: padded lane-dense path (tiled, full-width stores).
    x_odd = jax.random.normal(key, (3, 5, 7), dtype=jnp.float32)
    out_odd = jax.block_until_ready(chaoyang_forward(x_odd))
    assert out_odd.shape == x_odd.shape and out_odd.dtype == x_odd.dtype
    assert jnp.allclose(out_odd, x_odd + 1.0)

    # Medium array exercising the multi-block parallel grid (>= 4 blocks).
    x_big = jax.random.normal(key, (256, 512), dtype=jnp.float32)
    out_big = jax.block_until_ready(chaoyang_forward(x_big))
    assert out_big.shape == x_big.shape and out_big.dtype == x_big.dtype
    assert jnp.allclose(out_big, x_big + 1.0)

    print("KERNEL_OK")
</pallas_src>

<mosaic_0001>
module attributes {stable_mosaic.version = 11 : i64} {
  func.func @_add_one_scalar_kernel(%arg0: memref<1xf32, #tpu.memory_space<smem>>, %arg1: memref<1xf32, #tpu.memory_space<smem>>) attributes {dimension_semantics = [], scalar_prefetch = 0 : i64, scratch_operands = 0 : i64, tpu.core_type = #tpu.core_type<tc>} {
    %c0 = arith.constant 0 : index
    %0 = memref.load %arg0[%c0] : memref<1xf32, #tpu.memory_space<smem>>
    %cst = arith.constant 1.000000e+00 : f32
    %1 = arith.addf %0, %cst : f32
    %c0_0 = arith.constant 0 : index
    %2 = memref.load %arg1[%c0_0] : memref<1xf32, #tpu.memory_space<smem>>
    memref.store %1, %arg1[%c0_0] : memref<1xf32, #tpu.memory_space<smem>>
    return
  }
}

</mosaic_0001>

<llo_original>
// kernel: tpu_custom_call.1
$region0: #{tpu_custom_call.1}
  #allocation0 [shape = 'u32[]', space=smem, size = 0x4, offset = 0x4, fixed_abs, tag = 'smem constant byte address 0x4 - core index']
  #allocation1 [shape = 'u32[144,128]{1,0:T(1,128)}', space=vmem, size = 0x12000, scoped, tag = 'internal scratch']
  #allocation2 [shape = 'f32[1]{0:T(128)S(6)}', space=smem, size = 0x200, scoped, tag = 'scoped memory for tpu_custom_call.1']
  %s0 = inlined_call_operand.<no memory space> [shape: f32[1], index: 0, kind: input, shape index: {}]
  %s1 = inlined_call_operand.hbm [shape: f32[1], index: 1, kind: output, shape index: {}]
  %s2 = sld [smem:[#allocation0]]
  $region14: #{tpu_custom_call.1} parent=0
    _
  %s4 = ssub.s32 1, %s2
  %s5 = scalar_select 0, %s4, %s2
  %6 = sst [smem:[#allocation2]] %s0
  $region1: #{tpu_custom_call.1} parent=0
    #allocation3 [shape = 'u8[512]{0}', space=smem, size = 0x200, scoped, tag = 'output window, operand 0, single buffered']
    #allocation4 [shape = 's32[1]{0}', space=sflag, size = 0x4, scoped, tag = 'scoped memory for tpu_custom_call.1']
    %7 = vsyncpa [#allocation4], 0
    // Predicated region
    $region2: #{tpu_custom_call.1} parent=1 // pred_check
      _
    $region3: #{tpu_custom_call.1} parent=1 // pred_check_branch
      %9 = sbr.rel (0) target = $region5
    $region4: #{tpu_custom_call.1} parent=1 // pred_region
      _
    $region5: #{tpu_custom_call.1} parent=1 // pred_fallthru
      _
    %s10 = sld [smem:[#allocation2]]
    %s11 = sadd.f32 %s10, 1.0
    %s12 = scalar_lea.smem [#allocation3], 0
    %13 = sst [smem:[%s12]] %s11
    // Predicated region
    $region6: #{tpu_custom_call.1} parent=1 // pred_check
      _
    $region7: #{tpu_custom_call.1} parent=1 // pred_check_branch
      %15 = sbr.rel (0) target = $region9
    $region8: #{tpu_custom_call.1} parent=1 // pred_region
      %s17 = ssub.s32 16, 16
      %18 = vsyncadd [#allocation4], %s17
      %21 = dma.smem_to_hbm [#allocation3], 16, %s1, [#allocation4]
    $region9: #{tpu_custom_call.1} parent=1 // pred_fallthru
      _
    // Predicated region
    $region10: #{tpu_custom_call.1} parent=1 // pred_check
      _
    $region11: #{tpu_custom_call.1} parent=1 // pred_check_branch
      %23 = sbr.rel (0) target = $region13
    $region12: #{tpu_custom_call.1} parent=1 // pred_region
      %24 = dma.done [#allocation4], 16
    $region13: #{tpu_custom_call.1} parent=1 // pred_fallthru
      _
    %25 = sfence
    %26 = vsyncpa [#allocation4], 1

</llo_original>
